<compile_context>
chip_gen: v5e
topology: v5e:2x2
jax: 0.10.0
libtpu: 0.0.40
codegen_flags: <defaults>
</compile_context>

<pallas_src>
import jax
import jax.numpy as jnp
from jax.experimental import pallas as pl
from jax.experimental.pallas import tpu as pltpu


def _decoder_kernel(x_ref, w3_ref, b3_ref, w4_ref, b4_ref, o_ref):
    # x_ref : (TB, L) f32   w3_ref: (L, H) f32   b3_ref: (1, H) f32
    # w4_ref: (H, D)  f32   b4_ref: (1, D) f32   o_ref : (TB, D) bf16
    # Cast to bf16 in-register for the MXU; accumulate in f32.  Weights are
    # VMEM-resident (constant index_map), the per-step cast is tiny VPU work.
    x = x_ref[...].astype(jnp.bfloat16)
    w3 = w3_ref[...].astype(jnp.bfloat16)
    h = jnp.dot(x, w3, preferred_element_type=jnp.float32)
    h = jnp.maximum(h + b3_ref[...], 0.0)

    w4 = w4_ref[...].astype(jnp.bfloat16)
    y = jnp.dot(h.astype(jnp.bfloat16), w4, preferred_element_type=jnp.float32)
    y = y + b4_ref[...]
    # sigmoid = 1 / (1 + exp(-y)); exp + approx reciprocal both run on the EUP.
    o_ref[...] = pl.reciprocal(1.0 + jnp.exp(-y), approx=True).astype(o_ref.dtype)


def _round_up(x, m):
    return ((x + m - 1) // m) * m


def variational_decoder(x, w3, b3, w4, b4, *, block_b=1024):
    """x: (B, latent) f32, w3: (latent, 256), b3: (256,), w4: (256, D), b4: (D,).

    Returns (B, D) in bfloat16.
    """
    B, L = x.shape
    H = w3.shape[1]
    D = w4.shape[1]

    # Batch tile: multiple of 16 (bf16 sublane packing).  Small batches get a
    # single step; larger batches get >= 2 steps (each a multiple of 128) so
    # the "parallel" grid axis can engage both TensorCores on v7x.
    b16 = _round_up(B, 16)
    if b16 <= 256:
        tb = b16
    else:
        tb = min(block_b, _round_up(pl.cdiv(b16, 2), 128))

    grid = (pl.cdiv(B, tb),)

    out = pl.pallas_call(
        _decoder_kernel,
        out_shape=jax.ShapeDtypeStruct((B, D), jnp.bfloat16),
        grid=grid,
        in_specs=[
            pl.BlockSpec((tb, L), lambda i: (i, 0)),   # x tile marches over batch
            pl.BlockSpec((L, H), lambda i: (0, 0)),    # weights stay VMEM-resident
            pl.BlockSpec((1, H), lambda i: (0, 0)),
            pl.BlockSpec((H, D), lambda i: (0, 0)),
            pl.BlockSpec((1, D), lambda i: (0, 0)),
        ],
        out_specs=pl.BlockSpec((tb, D), lambda i: (i, 0)),
        compiler_params=pltpu.CompilerParams(
            dimension_semantics=("parallel",),  # batch tiles across TCs (v7x)
        ),
    )(x, w3, b3.reshape(1, H).astype(jnp.float32),
      w4, b4.reshape(1, D).astype(jnp.float32))

    return out


def _reference(x, w3, b3, w4, b4):
    h = jnp.maximum(x @ w3 + b3, 0.0)
    return jax.nn.sigmoid(h @ w4 + b4)


if __name__ == "__main__":
    # Shapes consistent with the module: latent_shape=32, input_shape=128.
    LATENT, HIDDEN, INPUT = 32, 256, 128

    key = jax.random.PRNGKey(0)
    k_x, k_w3, k_b3, k_w4, k_b4 = jax.random.split(key, 5)

    # Deterministic parameter init (Kaiming-uniform-ish bounds like nn.Linear).
    lim3 = 1.0 / jnp.sqrt(LATENT)
    w3 = jax.random.uniform(k_w3, (LATENT, HIDDEN), minval=-lim3, maxval=lim3,
                            dtype=jnp.float32)
    b3 = jax.random.uniform(k_b3, (HIDDEN,), minval=-lim3, maxval=lim3,
                            dtype=jnp.float32)
    lim4 = 1.0 / jnp.sqrt(HIDDEN)
    w4 = jax.random.uniform(k_w4, (HIDDEN, INPUT), minval=-lim4, maxval=lim4,
                            dtype=jnp.float32)
    b4 = jax.random.uniform(k_b4, (INPUT,), minval=-lim4, maxval=lim4,
                            dtype=jnp.float32)

    ok = True
    # (a) multi-tile batch: exercises the 2-step pipelined / parallel grid.
    # (b) small, non-multiple-of-16 batch: exercises the ragged last block.
    for B in (512, 20):
        x = jax.random.normal(jax.random.fold_in(k_x, B), (B, LATENT),
                              dtype=jnp.float32)
        out = variational_decoder(x, w3, b3, w4, b4)
        jax.block_until_ready(out)

        ref = _reference(x, w3, b3, w4, b4)
        assert out.shape == (B, INPUT)
        # bf16 operands + bf16 output + approx reciprocal vs f32 reference.
        ok = ok and bool(jnp.allclose(out.astype(jnp.float32), ref,
                                      atol=3e-2, rtol=3e-2))

    assert ok
    print("KERNEL_OK")
</pallas_src>

<mosaic_0001>
module attributes {stable_mosaic.version = 11 : i64} {
  func.func @_decoder_kernel(%arg0: i32, %arg1: memref<256x32xf32, #tpu.memory_space<vmem>>, %arg2: memref<32x256xf32, #tpu.memory_space<vmem>>, %arg3: memref<1x256xf32, #tpu.memory_space<vmem>>, %arg4: memref<256x128xf32, #tpu.memory_space<vmem>>, %arg5: memref<1x128xf32, #tpu.memory_space<vmem>>, %arg6: memref<256x128xbf16, #tpu.memory_space<vmem>>) attributes {dimension_semantics = [#tpu.dimension_semantics<parallel>], iteration_bounds = array<i64: 2>, scalar_prefetch = 0 : i64, scratch_operands = 0 : i64, tpu.core_type = #tpu.core_type<tc>, window_params = [{transform_indices = @transform_0, window_bounds = array<i64: 256, 32>}, {pipeline_mode = #tpu.pipeline_mode<synchronous>, transform_indices = @transform_1, window_bounds = array<i64: 32, 256>}, {pipeline_mode = #tpu.pipeline_mode<synchronous>, transform_indices = @transform_2, window_bounds = array<i64: 1, 256>}, {pipeline_mode = #tpu.pipeline_mode<synchronous>, transform_indices = @transform_3, window_bounds = array<i64: 256, 128>}, {pipeline_mode = #tpu.pipeline_mode<synchronous>, transform_indices = @transform_4, window_bounds = array<i64: 1, 128>}, {transform_indices = @transform_5, window_bounds = array<i64: 256, 128>}]} {
    %c0 = arith.constant 0 : index
    %c0_0 = arith.constant 0 : index
    %0 = vector.load %arg1[%c0, %c0_0] : memref<256x32xf32, #tpu.memory_space<vmem>>, vector<256x32xf32>
    %1 = arith.truncf %0 : vector<256x32xf32> to vector<256x32xbf16>
    %c0_1 = arith.constant 0 : index
    %c0_2 = arith.constant 0 : index
    %2 = vector.load %arg2[%c0_1, %c0_2] : memref<32x256xf32, #tpu.memory_space<vmem>>, vector<32x256xf32>
    %3 = arith.truncf %2 : vector<32x256xf32> to vector<32x256xbf16>
    %cst = arith.constant dense<0.000000e+00> : vector<256x256xf32>
    %4 = tpu.matmul %1, %3, %cst {dimension_numbers = #tpu.dot_dimension_numbers<[1], [0], [0], [1], [0, 0, 1, 1], [], []>} : vector<256x32xbf16>, vector<32x256xbf16>, vector<256x256xf32> -> vector<256x256xf32>
    %c0_3 = arith.constant 0 : index
    %c0_4 = arith.constant 0 : index
    %5 = vector.load %arg3[%c0_3, %c0_4] : memref<1x256xf32, #tpu.memory_space<vmem>>, vector<1x256xf32>
    %6 = vector.broadcast %5 : vector<1x256xf32> to vector<256x256xf32>
    %7 = arith.addf %4, %6 : vector<256x256xf32>
    %cst_5 = arith.constant 0.000000e+00 : f32
    %8 = vector.broadcast %cst_5 : f32 to vector<256x256xf32>
    %9 = arith.maximumf %7, %8 : vector<256x256xf32>
    %c0_6 = arith.constant 0 : index
    %c0_7 = arith.constant 0 : index
    %10 = vector.load %arg4[%c0_6, %c0_7] : memref<256x128xf32, #tpu.memory_space<vmem>>, vector<256x128xf32>
    %11 = arith.truncf %10 : vector<256x128xf32> to vector<256x128xbf16>
    %12 = arith.truncf %9 : vector<256x256xf32> to vector<256x256xbf16>
    %cst_8 = arith.constant dense<0.000000e+00> : vector<256x128xf32>
    %13 = tpu.matmul %12, %11, %cst_8 {dimension_numbers = #tpu.dot_dimension_numbers<[1], [0], [0], [1], [0, 0, 1, 1], [], []>} : vector<256x256xbf16>, vector<256x128xbf16>, vector<256x128xf32> -> vector<256x128xf32>
    %c0_9 = arith.constant 0 : index
    %c0_10 = arith.constant 0 : index
    %14 = vector.load %arg5[%c0_9, %c0_10] : memref<1x128xf32, #tpu.memory_space<vmem>>, vector<1x128xf32>
    %15 = vector.broadcast %14 : vector<1x128xf32> to vector<256x128xf32>
    %16 = arith.addf %13, %15 : vector<256x128xf32>
    %cst_11 = arith.constant 0.000000e+00 : f32
    %17 = vector.broadcast %cst_11 : f32 to vector<256x128xf32>
    %18 = arith.subf %17, %16 : vector<256x128xf32>
    %19 = math.exp %18 : vector<256x128xf32>
    %cst_12 = arith.constant 1.000000e+00 : f32
    %20 = vector.broadcast %cst_12 : f32 to vector<256x128xf32>
    %21 = arith.addf %20, %19 : vector<256x128xf32>
    %22 = tpu.reciprocal %21 {approx = true} : vector<256x128xf32> -> vector<256x128xf32>
    %23 = arith.truncf %22 : vector<256x128xf32> to vector<256x128xbf16>
    %c0_13 = arith.constant 0 : index
    %c0_14 = arith.constant 0 : index
    %24 = vector.load %arg6[%c0_13, %c0_14] : memref<256x128xbf16, #tpu.memory_space<vmem>>, vector<256x128xbf16>
    tpu.vector_store %arg6[%c0_13, %c0_14], %23 {strides = array<i32>} : memref<256x128xbf16, #tpu.memory_space<vmem>>, vector<256x128xbf16>,
    return
  }
  func.func @transform_0(%arg0: i32) -> (i32, i32) {
    %c0_i32 = arith.constant 0 : i32
    %c0_i32_0 = arith.constant 0 : i32
    return %arg0, %c0_i32 : i32, i32
  }
  func.func @transform_1(%arg0: i32) -> (i32, i32) {
    %c0_i32 = arith.constant 0 : i32
    %c0_i32_0 = arith.constant 0 : i32
    %c0_i32_1 = arith.constant 0 : i32
    return %c0_i32, %c0_i32_0 : i32, i32
  }
  func.func @transform_2(%arg0: i32) -> (i32, i32) {
    %c0_i32 = arith.constant 0 : i32
    %c0_i32_0 = arith.constant 0 : i32
    %c0_i32_1 = arith.constant 0 : i32
    return %c0_i32, %c0_i32_0 : i32, i32
  }
  func.func @transform_3(%arg0: i32) -> (i32, i32) {
    %c0_i32 = arith.constant 0 : i32
    %c0_i32_0 = arith.constant 0 : i32
    %c0_i32_1 = arith.constant 0 : i32
    return %c0_i32, %c0_i32_0 : i32, i32
  }
  func.func @transform_4(%arg0: i32) -> (i32, i32) {
    %c0_i32 = arith.constant 0 : i32
    %c0_i32_0 = arith.constant 0 : i32
    %c0_i32_1 = arith.constant 0 : i32
    return %c0_i32, %c0_i32_0 : i32, i32
  }
  func.func @transform_5(%arg0: i32) -> (i32, i32) {
    %c0_i32 = arith.constant 0 : i32
    %c0_i32_0 = arith.constant 0 : i32
    return %arg0, %c0_i32 : i32, i32
  }
}

</mosaic_0001>

<llo_original>
// kernel: tpu_custom_call.1
$region0: #{tpu_custom_call.1}
  #allocation0 [shape = 'u32[]', space=smem, size = 0x4, offset = 0x4, fixed_abs, tag = 'smem constant byte address 0x4 - core index']
  #allocation1 [shape = 'u32[72,128]{1,0:T(1,128)}', space=vmem, size = 0x9000, scoped, tag = 'internal scratch']
  %s0 = inlined_call_operand.vmem [shape: f32[512,32], index: 0, kind: input, shape index: {}]
  %s1 = inlined_call_operand.vmem [shape: f32[32,256], index: 1, kind: input, shape index: {}]
  %s2 = inlined_call_operand.vmem [shape: f32[1,256], index: 2, kind: input, shape index: {}]
  %s3 = inlined_call_operand.vmem [shape: f32[256,128], index: 3, kind: input, shape index: {}]
  %s4 = inlined_call_operand.vmem [shape: f32[1,128], index: 4, kind: input, shape index: {}]
  %s5 = inlined_call_operand.hbm [shape: bf16[512,128], index: 5, kind: output, shape index: {}]
  %s6 = sld [smem:[#allocation0]]
  $region53: #{tpu_custom_call.1} parent=0
    _
  %s8 = ssub.s32 1, %s6
  %s9 = scalar_select 0, %s8, %s6
  $region1: #{tpu_custom_call.1} parent=0
    #allocation2 [shape = 'u8[131072]{0}', space=vmem, size = 0x20000, scoped, tag = 'output window, operand 0']
    #allocation3 [shape = 's32[2]{0}', space=sflag, size = 0x8, scoped, tag = 'scoped memory for tpu_custom_call.1']
    %10 = vsyncpa [#allocation3], 0
    %s11 = scalar_lea.sflag [#allocation3], 1
    %12 = vsyncpa %s11, 0
    loop: start=0, step=1, limit=4
    $region2: #{tpu_custom_call.1} parent=1 // loop_pre_header
      _
    $region3: #{tpu_custom_call.1} parent=1 // loop_header
      %s14 = sphi 0, %s18
      %p15 = scmp.ge.s32.totalorder %s14, 4
      %s24 = sphi 0, %s26
      %s27 = sphi 0, %s24
      %s28 = sphi 0, %s27
      %s44 = sphi 0, %s28
      %s48 = sphi 0, %s48
      %s50 = sphi 0, %s48
      %s51 = sphi 0, %s50
      %s65 = sphi 0, %s51
      %s69 = sphi 0, %s69
      %s71 = sphi 0, %s69
      %s72 = sphi 0, %s71
      %s86 = sphi 0, %s72
      %s90 = sphi 0, %s90
      %s92 = sphi 0, %s90
      %s93 = sphi 0, %s92
      %s107 = sphi 0, %s93
      %s111 = sphi 0, %s111
      %s113 = sphi 0, %s111
      %s114 = sphi 0, %s113
      %s128 = sphi 0, %s114
      %s134 = sphi 0, %s136
      %s137 = sphi 0, %s134
      %s138 = sphi 0, %s137
      %s154 = sphi 0, %s138
    $region4: #{tpu_custom_call.1} parent=1 // loop_header_branch
      %17 = sbr.rel (%p15) target = $region8
    $region5: #{tpu_custom_call.1} parent=1 // loop_body
      %s19 = ssub.s32 %s14, 1
      %s20 = ssub.s32 %s14, 2
      %s21 = sadd.s32 %s14, 1
      %s22 = ssub.s32 %s14, %s21
      %p23 = scmp.eq.s32.totalorder %s22, 0
      %s25 = sadd.s32 %s24, 1
      %s26 = scalar_select %p23, %s24, %s25
      %p29 = pneg %p23
      %p30 = scmp.eq.s32.totalorder %s14, 1
      %p31 = por %p29, %p30
      %p32 = scmp.ne.s32.totalorder %s24, %s27
      %p33 = scmp.eq.s32.totalorder %s14, 0
      %p34 = por %p32, %p33
      %p35 = scmp.ne.s32.totalorder %s24, %s27
      %p36 = scmp.eq.s32.totalorder %s19, 1
      %p37 = por %p35, %p36
      %p38 = scmp.ne.s32.totalorder %s27, %s28
      %p39 = scmp.eq.s32.totalorder %s19, 0
      %p40 = por %p38, %p39
      %p41 = scmp.ne.s32.totalorder %s27, %s28
      %p42 = scmp.eq.s32.totalorder %s20, 1
      %p43 = por %p41, %p42
      %p45 = scmp.ne.s32.totalorder %s28, %s44
      %p46 = scmp.eq.s32.totalorder %s20, 0
      %p47 = por %p45, %p46
      %s49 = sadd.s32 %s48, 1
      %p52 = scmp.eq.s32.totalorder %s14, 1
      %p53 = scmp.ne.s32.totalorder %s48, %s50
      %p54 = scmp.eq.s32.totalorder %s14, 0
      %p55 = por %p53, %p54
      %p56 = scmp.ne.s32.totalorder %s48, %s50
      %p57 = scmp.eq.s32.totalorder %s19, 1
      %p58 = por %p56, %p57
      %p59 = scmp.ne.s32.totalorder %s50, %s51
      %p60 = scmp.eq.s32.totalorder %s19, 0
      %p61 = por %p59, %p60
      %p62 = scmp.ne.s32.totalorder %s50, %s51
      %p63 = scmp.eq.s32.totalorder %s20, 1
      %p64 = por %p62, %p63
      %p66 = scmp.ne.s32.totalorder %s51, %s65
      %p67 = scmp.eq.s32.totalorder %s20, 0
      %p68 = por %p66, %p67
      %s70 = sadd.s32 %s69, 1
      %p73 = scmp.eq.s32.totalorder %s14, 1
      %p74 = scmp.ne.s32.totalorder %s69, %s71
      %p75 = scmp.eq.s32.totalorder %s14, 0
      %p76 = por %p74, %p75
      %p77 = scmp.ne.s32.totalorder %s69, %s71
      %p78 = scmp.eq.s32.totalorder %s19, 1
      %p79 = por %p77, %p78
      %p80 = scmp.ne.s32.totalorder %s71, %s72
      %p81 = scmp.eq.s32.totalorder %s19, 0
      %p82 = por %p80, %p81
      %p83 = scmp.ne.s32.totalorder %s71, %s72
      %p84 = scmp.eq.s32.totalorder %s20, 1
      %p85 = por %p83, %p84
      %p87 = scmp.ne.s32.totalorder %s72, %s86
      %p88 = scmp.eq.s32.totalorder %s20, 0
      %p89 = por %p87, %p88
      %s91 = sadd.s32 %s90, 1
      %p94 = scmp.eq.s32.totalorder %s14, 1
      %p95 = scmp.ne.s32.totalorder %s90, %s92
      %p96 = scmp.eq.s32.totalorder %s14, 0
      %p97 = por %p95, %p96
      %p98 = scmp.ne.s32.totalorder %s90, %s92
      %p99 = scmp.eq.s32.totalorder %s19, 1
      %p100 = por %p98, %p99
      %p101 = scmp.ne.s32.totalorder %s92, %s93
      %p102 = scmp.eq.s32.totalorder %s19, 0
      %p103 = por %p101, %p102
      %p104 = scmp.ne.s32.totalorder %s92, %s93
      %p105 = scmp.eq.s32.totalorder %s20, 1
      %p106 = por %p104, %p105
      %p108 = scmp.ne.s32.totalorder %s93, %s107
      %p109 = scmp.eq.s32.totalorder %s20, 0
      %p110 = por %p108, %p109
      %s112 = sadd.s32 %s111, 1
      %p115 = scmp.eq.s32.totalorder %s14, 1
      %p116 = scmp.ne.s32.totalorder %s111, %s113
      %p117 = scmp.eq.s32.totalorder %s14, 0
      %p118 = por %p116, %p117
      %p119 = scmp.ne.s32.totalorder %s111, %s113
      %p120 = scmp.eq.s32.totalorder %s19, 1
      %p121 = por %p119, %p120
      %p122 = scmp.ne.s32.totalorder %s113, %s114
      %p123 = scmp.eq.s32.totalorder %s19, 0
      %p124 = por %p122, %p123
      %p125 = scmp.ne.s32.totalorder %s113, %s114
      %p126 = scmp.eq.s32.totalorder %s20, 1
      %p127 = por %p125, %p126
      %p129 = scmp.ne.s32.totalorder %s114, %s128
      %p130 = scmp.eq.s32.totalorder %s20, 0
      %p131 = por %p129, %p130
      %s132 = ssub.s32 %s14, %s21
      %p133 = scmp.eq.s32.totalorder %s132, 0
      %s135 = sadd.s32 %s134, 1
      %s136 = scalar_select %p133, %s134, %s135
      %p139 = pneg %p133
      %p140 = scmp.eq.s32.totalorder %s14, 1
      %p141 = por %p139, %p140
      %p142 = scmp.ne.s32.totalorder %s134, %s137
      %p143 = scmp.eq.s32.totalorder %s14, 0
      %p144 = por %p142, %p143
      %p145 = scmp.ne.s32.totalorder %s134, %s137
      %p146 = scmp.eq.s32.totalorder %s19, 1
      %p147 = por %p145, %p146
      %p148 = scmp.ne.s32.totalorder %s137, %s138
      %p149 = scmp.eq.s32.totalorder %s19, 0
      %p150 = por %p148, %p149
      %p151 = scmp.ne.s32.totalorder %s137, %s138
      %p152 = scmp.eq.s32.totalorder %s20, 1
      %p153 = por %p151, %p152
      %p155 = scmp.ne.s32.totalorder %s138, %s154
      %p156 = scmp.eq.s32.totalorder %s20, 0
      %p157 = por %p155, %p156
      %p158 = scmp.le.s32.totalorder 1, %s14
      %p159 = scmp.lt.s32.totalorder %s14, 3
      %p160 = pnand %p158, %p159
      %p161 = pneg %p160
      // Predicated region
      $region9: #{tpu_custom_call.1} parent=5 // pred_check
        _
      $region10: #{tpu_custom_call.1} parent=5 // pred_check_branch
        %163 = sbr.rel (%p160) target = $region12
      $region11: #{tpu_custom_call.1} parent=5 // pred_region
        %s164 = ssub.s32 %s14, 1
        // Predicated region
        $region13: #{tpu_custom_call.1} parent=11 // pred_check
          %p165 = pneg %p61
        $region14: #{tpu_custom_call.1} parent=11 // pred_check_branch
          %167 = sbr.rel (%p165) target = $region16
        $region15: #{tpu_custom_call.1} parent=11 // pred_region
          _
        $region16: #{tpu_custom_call.1} parent=11 // pred_fallthru
          _
        // Predicated region
        $region17: #{tpu_custom_call.1} parent=11 // pred_check
          %p168 = pneg %p82
        $region18: #{tpu_custom_call.1} parent=11 // pred_check_branch
          %170 = sbr.rel (%p168) target = $region20
        $region19: #{tpu_custom_call.1} parent=11 // pred_region
          _
        $region20: #{tpu_custom_call.1} parent=11 // pred_fallthru
          _
        // Predicated region
        $region21: #{tpu_custom_call.1} parent=11 // pred_check
          %p171 = pneg %p103
        $region22: #{tpu_custom_call.1} parent=11 // pred_check_branch
          %173 = sbr.rel (%p171) target = $region24
        $region23: #{tpu_custom_call.1} parent=11 // pred_region
          _
        $region24: #{tpu_custom_call.1} parent=11 // pred_fallthru
          _
        // Predicated region
        $region25: #{tpu_custom_call.1} parent=11 // pred_check
          %p174 = pneg %p124
        $region26: #{tpu_custom_call.1} parent=11 // pred_check_branch
          %176 = sbr.rel (%p174) target = $region28
        $region27: #{tpu_custom_call.1} parent=11 // pred_region
          _
        $region28: #{tpu_custom_call.1} parent=11 // pred_fallthru
          _
      $region12: #{tpu_custom_call.1} parent=5 // pred_fallthru
        _
      %p177 = scmp.lt.s32.totalorder %s14, 2
      // Predicated region
      $region29: #{tpu_custom_call.1} parent=5 // pred_check
        %p178 = pneg %p177
      $region30: #{tpu_custom_call.1} parent=5 // pred_check_branch
        %180 = sbr.rel (%p178) target = $region32
      $region31: #{tpu_custom_call.1} parent=5 // pred_region
        // Predicated region
        $region33: #{tpu_custom_call.1} parent=31 // pred_check
          %p181 = pneg %p34
        $region34: #{tpu_custom_call.1} parent=31 // pred_check_branch
          %183 = sbr.rel (%p181) target = $region36
        $region35: #{tpu_custom_call.1} parent=31 // pred_region
          %s184 = smul.u32 32, %s14
          %p185 = scmp.lt.s32.totalorder %s184, 63
          %s186 = scalar_select %p185, %s184, 63
          %s187 = smul.addr %s186, 8
          %s188 = scalar_lea.vmem %s0, %s187
          %s189 = smul.u32 32, %s14
        $region36: #{tpu_custom_call.1} parent=31 // pred_fallthru
          _
      $region32: #{tpu_custom_call.1} parent=5 // pred_fallthru
        _
      %p190 = scmp.le.s32.totalorder 1, %s14
      %p191 = scmp.lt.s32.totalorder %s14, 3
      %p192 = pnand %p190, %p191
      %p193 = pneg %p192
      // Predicated region
      $region37: #{tpu_custom_call.1} parent=5 // pred_check
        _
      $region38: #{tpu_custom_call.1} parent=5 // pred_check_branch
        %195 = sbr.rel (%p192) target = $region40
      $region39: #{tpu_custom_call.1} parent=5 // pred_region
        %s196 = ssub.s32 %s14, 1
        %s197 = smul.u32 32, %s19
        %p198 = scmp.lt.s32.totalorder %s197, 63
        %s199 = scalar_select %p198, %s197, 63
        %s200 = smul.addr %s199, 8
        %s201 = scalar_lea.vmem %s0, %s200
        %p202 = pneg %p40
        %p203 = pneg %p37
        %p204 = pneg %p61
        %p205 = pneg %p58
        %p206 = pneg %p82
        %p207 = pneg %p79
        %p208 = pneg %p103
        %p209 = pneg %p100
        %p210 = pneg %p124
        %p211 = pneg %p121
        %p212 = pneg %p150
        %p213 = pneg %p147
        %s214 = sand.u32 %s137, 1
        %s215 = scalar_lea.sflag [#allocation3], %s214
        %s216 = sand.u32 %s137, 1
        %s217 = smul.addr %s216, 128
        %s218 = scalar_lea.vmem [#allocation2], %s217
        %s219 = smul.u32 32, %s19
        %p220 = scmp.lt.s32.totalorder %s219, 63
        %s221 = scalar_select %p220, %s219, 63
        %s222 = smul.addr %s221, 8
        %s223 = scalar_lea.vmem %s0, %s222
        %s224 = smul.u32 32, %s19
        %s225 = smul.u32 32, %s19
        %v227 = vld [vmem:[%s223] sm:$0xff]
        %v228 = vld [vmem:[%s223 + $0x8] sm:$0xff]
        %v229 = vld [vmem:[%s223 + $0x10] sm:$0xff]
        %v230 = vld [vmem:[%s223 + $0x18] sm:$0xff]
        %v231 = vld [vmem:[%s223 + $0x20] sm:$0xff]
        %v232 = vld [vmem:[%s223 + $0x28] sm:$0xff]
        %v233 = vld [vmem:[%s223 + $0x30] sm:$0xff]
        %v234 = vld [vmem:[%s223 + $0x38] sm:$0xff]
        %v235 = vld [vmem:[%s223 + $0x40] sm:$0xff]
        %v236 = vld [vmem:[%s223 + $0x48] sm:$0xff]
        %v237 = vld [vmem:[%s223 + $0x50] sm:$0xff]
        %v238 = vld [vmem:[%s223 + $0x58] sm:$0xff]
        %v239 = vld [vmem:[%s223 + $0x60] sm:$0xff]
        %v240 = vld [vmem:[%s223 + $0x68] sm:$0xff]
        %v241 = vld [vmem:[%s223 + $0x70] sm:$0xff]
        %v242 = vld [vmem:[%s223 + $0x78] sm:$0xff]
        %v243 = vld [vmem:[%s223 + $0x80] sm:$0xff]
        %v244 = vld [vmem:[%s223 + $0x88] sm:$0xff]
        %v245 = vld [vmem:[%s223 + $0x90] sm:$0xff]
        %v246 = vld [vmem:[%s223 + $0x98] sm:$0xff]
        %v247 = vld [vmem:[%s223 + $0xa0] sm:$0xff]
        %v248 = vld [vmem:[%s223 + $0xa8] sm:$0xff]
        %v249 = vld [vmem:[%s223 + $0xb0] sm:$0xff]
        %v250 = vld [vmem:[%s223 + $0xb8] sm:$0xff]
        %v251 = vld [vmem:[%s223 + $0xc0] sm:$0xff]
        %v252 = vld [vmem:[%s223 + $0xc8] sm:$0xff]
        %v253 = vld [vmem:[%s223 + $0xd0] sm:$0xff]
        %v254 = vld [vmem:[%s223 + $0xd8] sm:$0xff]
        %v255 = vld [vmem:[%s223 + $0xe0] sm:$0xff]
        %v256 = vld [vmem:[%s223 + $0xe8] sm:$0xff]
        %v257 = vld [vmem:[%s223 + $0xf0] sm:$0xff]
        %v258 = vld [vmem:[%s223 + $0xf8] sm:$0xff]
        %v259 = vpack.c.bf16 %v228, %v227
        %v260 = vpack.c.bf16 %v230, %v229
        %v261 = vpack.c.bf16 %v232, %v231
        %v262 = vpack.c.bf16 %v234, %v233
        %v263 = vpack.c.bf16 %v236, %v235
        %v264 = vpack.c.bf16 %v238, %v237
        %v265 = vpack.c.bf16 %v240, %v239
        %v266 = vpack.c.bf16 %v242, %v241
        %v267 = vpack.c.bf16 %v244, %v243
        %v268 = vpack.c.bf16 %v246, %v245
        %v269 = vpack.c.bf16 %v248, %v247
        %v270 = vpack.c.bf16 %v250, %v249
        %v271 = vpack.c.bf16 %v252, %v251
        %v272 = vpack.c.bf16 %v254, %v253
        %v273 = vpack.c.bf16 %v256, %v255
        %v274 = vpack.c.bf16 %v258, %v257
        %v275 = vld [vmem:[%s1] sm:$0xff]
        %v276 = vld [vmem:[%s1 + $0x8] sm:$0xff]
        %v277 = vld [vmem:[%s1 + $0x10] sm:$0xff]
        %v278 = vld [vmem:[%s1 + $0x18] sm:$0xff]
        %v279 = vld [vmem:[%s1 + $0x20] sm:$0xff]
        %v280 = vld [vmem:[%s1 + $0x28] sm:$0xff]
        %v281 = vld [vmem:[%s1 + $0x30] sm:$0xff]
        %v282 = vld [vmem:[%s1 + $0x38] sm:$0xff]
        %v283 = vpack.c.bf16 %v277, %v275
        %v284 = vpack.c.bf16 %v278, %v276
        %v285 = vpack.c.bf16 %v281, %v279
        %v286 = vpack.c.bf16 %v282, %v280
        %v287 = vld [vmem:[%s2] sm:$0x3]
        %v289 = vperm.slane %v287, 0
        %v290 = vperm.slane %v287, 1
        %vm293 = vcmask 261120
        %v295 = vsel %vm293, %v259, 0
        %v298 = vsel %vm293, %v260, 0
        %v301 = vsel %vm293, %v261, 0
        %v304 = vsel %vm293, %v262, 0
        %v307 = vsel %vm293, %v263, 0
        %v310 = vsel %vm293, %v264, 0
        %v313 = vsel %vm293, %v265, 0
        %v316 = vsel %vm293, %v266, 0
        %v319 = vsel %vm293, %v267, 0
        %v322 = vsel %vm293, %v268, 0
        %v325 = vsel %vm293, %v269, 0
        %v328 = vsel %vm293, %v270, 0
        %v331 = vsel %vm293, %v271, 0
        %v334 = vsel %vm293, %v272, 0
        %v337 = vsel %vm293, %v273, 0
        %v340 = vsel %vm293, %v274, 0
        %342 = vmatpush.bf16.msra.mxu0 0
        %343 = vmatpush.bf16.msra.mxu0 0
        %344 = vmatpush.bf16.msra.mxu0 0
        %345 = vmatpush.bf16.msra.mxu0 0
        %346 = vmatpush.bf16.msra.mxu0 0
        %347 = vmatpush.bf16.msra.mxu0 0
        %348 = vmatpush.bf16.msra.mxu0 %v285
        %349 = vmatpush.bf16.msra.mxu0 %v283
        %350 = vmatmul.bf16.gmra.mxu0 %v295
        %v351 = vpop.f32.mrf.mxu0
        %v352 = vadd.f32 %v289, %v351
        %v353 = vpop.f32.mrf.mxu0
        %v354 = vadd.f32 %v289, %v353
        %355 = vmatmul.bf16.gmra.mxu0 %v298
        %v356 = vpop.f32.mrf.mxu0
        %v357 = vadd.f32 %v289, %v356
        %v358 = vpop.f32.mrf.mxu0
        %v359 = vadd.f32 %v289, %v358
        %360 = vmatmul.bf16.gmra.mxu0 %v301
        %v361 = vpop.f32.mrf.mxu0
        %v362 = vadd.f32 %v289, %v361
        %v363 = vpop.f32.mrf.mxu0
        %v364 = vadd.f32 %v289, %v363
        %365 = vmatmul.bf16.gmra.mxu0 %v304
        %v366 = vpop.f32.mrf.mxu0
        %v367 = vadd.f32 %v289, %v366
        %v368 = vpop.f32.mrf.mxu0
        %v369 = vadd.f32 %v289, %v368
        %370 = vmatmul.bf16.gmra.mxu0 %v307
        %v371 = vpop.f32.mrf.mxu0
        %v372 = vadd.f32 %v289, %v371
        %v373 = vpop.f32.mrf.mxu0
        %v374 = vadd.f32 %v289, %v373
        %375 = vmatmul.bf16.gmra.mxu0 %v310
        %v376 = vpop.f32.mrf.mxu0
        %v377 = vadd.f32 %v289, %v376
        %v378 = vpop.f32.mrf.mxu0
        %v379 = vadd.f32 %v289, %v378
        %380 = vmatmul.bf16.gmra.mxu0 %v313
        %v381 = vpop.f32.mrf.mxu0
        %v382 = vadd.f32 %v289, %v381
        %v383 = vpop.f32.mrf.mxu0
        %v384 = vadd.f32 %v289, %v383
        %385 = vmatmul.bf16.gmra.mxu0 %v316
        %v386 = vpop.f32.mrf.mxu0
        %v387 = vadd.f32 %v289, %v386
        %v388 = vpop.f32.mrf.mxu0
        %v389 = vadd.f32 %v289, %v388
        %390 = vmatmul.bf16.gmra.mxu0 %v319
        %v391 = vpop.f32.mrf.mxu0
        %v392 = vadd.f32 %v289, %v391
        %v393 = vpop.f32.mrf.mxu0
        %v394 = vadd.f32 %v289, %v393
        %395 = vmatmul.bf16.gmra.mxu0 %v322
        %v396 = vpop.f32.mrf.mxu0
        %v397 = vadd.f32 %v289, %v396
        %v398 = vpop.f32.mrf.mxu0
        %v399 = vadd.f32 %v289, %v398
        %400 = vmatmul.bf16.gmra.mxu0 %v325
        %v401 = vpop.f32.mrf.mxu0
        %v402 = vadd.f32 %v289, %v401
        %v403 = vpop.f32.mrf.mxu0
        %v404 = vadd.f32 %v289, %v403
        %405 = vmatmul.bf16.gmra.mxu0 %v328
        %v406 = vpop.f32.mrf.mxu0
        %v407 = vadd.f32 %v289, %v406
        %v408 = vpop.f32.mrf.mxu0
        %v409 = vadd.f32 %v289, %v408
        %410 = vmatmul.bf16.gmra.mxu0 %v331
        %v411 = vpop.f32.mrf.mxu0
        %v412 = vadd.f32 %v289, %v411
        %v413 = vpop.f32.mrf.mxu0
        %v414 = vadd.f32 %v289, %v413
        %415 = vmatmul.bf16.gmra.mxu0 %v334
        %v416 = vpop.f32.mrf.mxu0
        %v417 = vadd.f32 %v289, %v416
        %v418 = vpop.f32.mrf.mxu0
        %v419 = vadd.f32 %v289, %v418
        %420 = vmatmul.bf16.gmra.mxu0 %v337
        %v421 = vpop.f32.mrf.mxu0
        %v422 = vadd.f32 %v289, %v421
        %v423 = vpop.f32.mrf.mxu0
        %v424 = vadd.f32 %v289, %v423
        %425 = vmatmul.bf16.gmra.mxu0 %v340
        %v426 = vpop.f32.mrf.mxu0
        %v427 = vadd.f32 %v289, %v426
        %v428 = vpop.f32.mrf.mxu0
        %v429 = vadd.f32 %v289, %v428
        %430 = vdwg.mxu0
        %431 = vmatpush.bf16.msra.mxu0 0
        %432 = vmatpush.bf16.msra.mxu0 0
        %433 = vmatpush.bf16.msra.mxu0 0
        %434 = vmatpush.bf16.msra.mxu0 0
        %435 = vmatpush.bf16.msra.mxu0 0
        %436 = vmatpush.bf16.msra.mxu0 0
        %437 = vmatpush.bf16.msra.mxu0 %v286
        %438 = vmatpush.bf16.msra.mxu0 %v284
        %439 = vmatmul.bf16.gmra.mxu0 %v295
        %v440 = vpop.f32.mrf.mxu0
        %v441 = vadd.f32 %v290, %v440
        %v442 = vpop.f32.mrf.mxu0
        %v443 = vadd.f32 %v290, %v442
        %444 = vmatmul.bf16.gmra.mxu0 %v298
        %v445 = vpop.f32.mrf.mxu0
        %v446 = vadd.f32 %v290, %v445
        %v447 = vpop.f32.mrf.mxu0
        %v448 = vadd.f32 %v290, %v447
        %449 = vmatmul.bf16.gmra.mxu0 %v301
        %v450 = vpop.f32.mrf.mxu0
        %v451 = vadd.f32 %v290, %v450
        %v452 = vpop.f32.mrf.mxu0
        %v453 = vadd.f32 %v290, %v452
        %454 = vmatmul.bf16.gmra.mxu0 %v304
        %v455 = vpop.f32.mrf.mxu0
        %v456 = vadd.f32 %v290, %v455
        %v457 = vpop.f32.mrf.mxu0
        %v458 = vadd.f32 %v290, %v457
        %459 = vmatmul.bf16.gmra.mxu0 %v307
        %v460 = vpop.f32.mrf.mxu0
        %v461 = vadd.f32 %v290, %v460
        %v462 = vpop.f32.mrf.mxu0
        %v463 = vadd.f32 %v290, %v462
        %464 = vmatmul.bf16.gmra.mxu0 %v310
        %v465 = vpop.f32.mrf.mxu0
        %v466 = vadd.f32 %v290, %v465
        %v467 = vpop.f32.mrf.mxu0
        %v468 = vadd.f32 %v290, %v467
        %469 = vmatmul.bf16.gmra.mxu0 %v313
        %v470 = vpop.f32.mrf.mxu0
        %v471 = vadd.f32 %v290, %v470
        %v472 = vpop.f32.mrf.mxu0
        %v473 = vadd.f32 %v290, %v472
        %474 = vmatmul.bf16.gmra.mxu0 %v316
        %v475 = vpop.f32.mrf.mxu0
        %v476 = vadd.f32 %v290, %v475
        %v477 = vpop.f32.mrf.mxu0
        %v478 = vadd.f32 %v290, %v477
        %479 = vmatmul.bf16.gmra.mxu0 %v319
        %v480 = vpop.f32.mrf.mxu0
        %v481 = vadd.f32 %v290, %v480
        %v482 = vpop.f32.mrf.mxu0
        %v483 = vadd.f32 %v290, %v482
        %484 = vmatmul.bf16.gmra.mxu0 %v322
        %v485 = vpop.f32.mrf.mxu0
        %v486 = vadd.f32 %v290, %v485
        %v487 = vpop.f32.mrf.mxu0
        %v488 = vadd.f32 %v290, %v487
        %489 = vmatmul.bf16.gmra.mxu0 %v325
        %v490 = vpop.f32.mrf.mxu0
        %v491 = vadd.f32 %v290, %v490
        %v492 = vpop.f32.mrf.mxu0
        %v493 = vadd.f32 %v290, %v492
        %494 = vmatmul.bf16.gmra.mxu0 %v328
        %v495 = vpop.f32.mrf.mxu0
        %v496 = vadd.f32 %v290, %v495
        %v497 = vpop.f32.mrf.mxu0
        %v498 = vadd.f32 %v290, %v497
        %499 = vmatmul.bf16.gmra.mxu0 %v331
        %v500 = vpop.f32.mrf.mxu0
        %v501 = vadd.f32 %v290, %v500
        %v502 = vpop.f32.mrf.mxu0
        %v503 = vadd.f32 %v290, %v502
        %504 = vmatmul.bf16.gmra.mxu0 %v334
        %v505 = vpop.f32.mrf.mxu0
        %v506 = vadd.f32 %v290, %v505
        %v507 = vpop.f32.mrf.mxu0
        %v508 = vadd.f32 %v290, %v507
        %509 = vmatmul.bf16.gmra.mxu0 %v337
        %v510 = vpop.f32.mrf.mxu0
        %v511 = vadd.f32 %v290, %v510
        %v512 = vpop.f32.mrf.mxu0
        %v513 = vadd.f32 %v290, %v512
        %514 = vmatmul.bf16.gmra.mxu0 %v340
        %v515 = vpop.f32.mrf.mxu0
        %v516 = vadd.f32 %v290, %v515
        %v517 = vpop.f32.mrf.mxu0
        %v518 = vadd.f32 %v290, %v517
        %519 = vdwg.mxu0
        %v520 = vmax.f32 %v352, 0.0
        %v521 = vmax.f32 %v441, 0.0
        %v522 = vmax.f32 %v354, 0.0
        %v523 = vmax.f32 %v443, 0.0
        %v524 = vmax.f32 %v357, 0.0
        %v525 = vmax.f32 %v446, 0.0
        %v526 = vmax.f32 %v359, 0.0
        %v527 = vmax.f32 %v448, 0.0
        %v528 = vmax.f32 %v362, 0.0
        %v529 = vmax.f32 %v451, 0.0
        %v530 = vmax.f32 %v364, 0.0
        %v531 = vmax.f32 %v453, 0.0
        %v532 = vmax.f32 %v367, 0.0
        %v533 = vmax.f32 %v456, 0.0
        %v534 = vmax.f32 %v369, 0.0
        %v535 = vmax.f32 %v458, 0.0
        %v536 = vmax.f32 %v372, 0.0
        %v537 = vmax.f32 %v461, 0.0
        %v538 = vmax.f32 %v374, 0.0
        %v539 = vmax.f32 %v463, 0.0
        %v540 = vmax.f32 %v377, 0.0
        %v541 = vmax.f32 %v466, 0.0
        %v542 = vmax.f32 %v379, 0.0
        %v543 = vmax.f32 %v468, 0.0
        %v544 = vmax.f32 %v382, 0.0
        %v545 = vmax.f32 %v471, 0.0
        %v546 = vmax.f32 %v384, 0.0
        %v547 = vmax.f32 %v473, 0.0
        %v548 = vmax.f32 %v387, 0.0
        %v549 = vmax.f32 %v476, 0.0
        %v550 = vmax.f32 %v389, 0.0
        %v551 = vmax.f32 %v478, 0.0
        %v552 = vmax.f32 %v392, 0.0
        %v553 = vmax.f32 %v481, 0.0
        %v554 = vmax.f32 %v394, 0.0
        %v555 = vmax.f32 %v483, 0.0
        %v556 = vmax.f32 %v397, 0.0
        %v557 = vmax.f32 %v486, 0.0
        %v558 = vmax.f32 %v399, 0.0
        %v559 = vmax.f32 %v488, 0.0
        %v560 = vmax.f32 %v402, 0.0
        %v561 = vmax.f32 %v491, 0.0
        %v562 = vmax.f32 %v404, 0.0
        %v563 = vmax.f32 %v493, 0.0
        %v564 = vmax.f32 %v407, 0.0
        %v565 = vmax.f32 %v496, 0.0
        %v566 = vmax.f32 %v409, 0.0
        %v567 = vmax.f32 %v498, 0.0
        %v568 = vmax.f32 %v412, 0.0
        %v569 = vmax.f32 %v501, 0.0
        %v570 = vmax.f32 %v414, 0.0
        %v571 = vmax.f32 %v503, 0.0
        %v572 = vmax.f32 %v417, 0.0
        %v573 = vmax.f32 %v506, 0.0
        %v574 = vmax.f32 %v419, 0.0
        %v575 = vmax.f32 %v508, 0.0
        %v576 = vmax.f32 %v422, 0.0
        %v577 = vmax.f32 %v511, 0.0
        %v578 = vmax.f32 %v424, 0.0
        %v579 = vmax.f32 %v513, 0.0
        %v580 = vmax.f32 %v427, 0.0
        %v581 = vmax.f32 %v516, 0.0
        %v582 = vmax.f32 %v429, 0.0
        %v583 = vmax.f32 %v518, 0.0
        %v584 = vld [vmem:[%s3] sm:$0xff]
        %v585 = vld [vmem:[%s3 + $0x8] sm:$0xff]
        %v586 = vld [vmem:[%s3 + $0x10] sm:$0xff]
        %v587 = vld [vmem:[%s3 + $0x18] sm:$0xff]
        %v588 = vld [vmem:[%s3 + $0x20] sm:$0xff]
        %v589 = vld [vmem:[%s3 + $0x28] sm:$0xff]
        %v590 = vld [vmem:[%s3 + $0x30] sm:$0xff]
        %v591 = vld [vmem:[%s3 + $0x38] sm:$0xff]
        %v592 = vld [vmem:[%s3 + $0x40] sm:$0xff]
        %v593 = vld [vmem:[%s3 + $0x48] sm:$0xff]
        %v594 = vld [vmem:[%s3 + $0x50] sm:$0xff]
        %v595 = vld [vmem:[%s3 + $0x58] sm:$0xff]
        %v596 = vld [vmem:[%s3 + $0x60] sm:$0xff]
        %v597 = vld [vmem:[%s3 + $0x68] sm:$0xff]
        %v598 = vld [vmem:[%s3 + $0x70] sm:$0xff]
        %v599 = vld [vmem:[%s3 + $0x78] sm:$0xff]
        %v600 = vld [vmem:[%s3 + $0x80] sm:$0xff]
        %v601 = vld [vmem:[%s3 + $0x88] sm:$0xff]
        %v602 = vld [vmem:[%s3 + $0x90] sm:$0xff]
        %v603 = vld [vmem:[%s3 + $0x98] sm:$0xff]
        %v604 = vld [vmem:[%s3 + $0xa0] sm:$0xff]
        %v605 = vld [vmem:[%s3 + $0xa8] sm:$0xff]
        %v606 = vld [vmem:[%s3 + $0xb0] sm:$0xff]
        %v607 = vld [vmem:[%s3 + $0xb8] sm:$0xff]
        %v608 = vld [vmem:[%s3 + $0xc0] sm:$0xff]
        %v609 = vld [vmem:[%s3 + $0xc8] sm:$0xff]
        %v610 = vld [vmem:[%s3 + $0xd0] sm:$0xff]
        %v611 = vld [vmem:[%s3 + $0xd8] sm:$0xff]
        %v612 = vld [vmem:[%s3 + $0xe0] sm:$0xff]
        %v613 = vld [vmem:[%s3 + $0xe8] sm:$0xff]
        %v614 = vld [vmem:[%s3 + $0xf0] sm:$0xff]
        %v615 = vld [vmem:[%s3 + $0xf8] sm:$0xff]
        %v616 = vpack.c.bf16 %v585, %v584
        %v617 = vpack.c.bf16 %v587, %v586
        %v618 = vpack.c.bf16 %v589, %v588
        %v619 = vpack.c.bf16 %v591, %v590
        %v620 = vpack.c.bf16 %v593, %v592
        %v621 = vpack.c.bf16 %v595, %v594
        %v622 = vpack.c.bf16 %v597, %v596
        %v623 = vpack.c.bf16 %v599, %v598
        %v624 = vpack.c.bf16 %v601, %v600
        %v625 = vpack.c.bf16 %v603, %v602
        %v626 = vpack.c.bf16 %v605, %v604
        %v627 = vpack.c.bf16 %v607, %v606
        %v628 = vpack.c.bf16 %v609, %v608
        %v629 = vpack.c.bf16 %v611, %v610
        %v630 = vpack.c.bf16 %v613, %v612
        %v631 = vpack.c.bf16 %v615, %v614
        %v632 = vpack.c.bf16 %v522, %v520
        %v633 = vpack.c.bf16 %v523, %v521
        %v634 = vpack.c.bf16 %v526, %v524
        %v635 = vpack.c.bf16 %v527, %v525
        %v636 = vpack.c.bf16 %v530, %v528
        %v637 = vpack.c.bf16 %v531, %v529
        %v638 = vpack.c.bf16 %v534, %v532
        %v639 = vpack.c.bf16 %v535, %v533
        %v640 = vpack.c.bf16 %v538, %v536
        %v641 = vpack.c.bf16 %v539, %v537
        %v642 = vpack.c.bf16 %v542, %v540
        %v643 = vpack.c.bf16 %v543, %v541
        %v644 = vpack.c.bf16 %v546, %v544
        %v645 = vpack.c.bf16 %v547, %v545
        %v646 = vpack.c.bf16 %v550, %v548
        %v647 = vpack.c.bf16 %v551, %v549
        %v648 = vpack.c.bf16 %v554, %v552
        %v649 = vpack.c.bf16 %v555, %v553
        %v650 = vpack.c.bf16 %v558, %v556
        %v651 = vpack.c.bf16 %v559, %v557
        %v652 = vpack.c.bf16 %v562, %v560
        %v653 = vpack.c.bf16 %v563, %v561
        %v654 = vpack.c.bf16 %v566, %v564
        %v655 = vpack.c.bf16 %v567, %v565
        %v656 = vpack.c.bf16 %v570, %v568
        %v657 = vpack.c.bf16 %v571, %v569
        %v658 = vpack.c.bf16 %v574, %v572
        %v659 = vpack.c.bf16 %v575, %v573
        %v660 = vpack.c.bf16 %v578, %v576
        %v661 = vpack.c.bf16 %v579, %v577
        %v662 = vpack.c.bf16 %v582, %v580
        %v663 = vpack.c.bf16 %v583, %v581
        %v664 = vld [vmem:[%s4] sm:$0x1]
        %v666 = vperm.slane %v664, 0
        %668 = vmatpush.bf16.msra.mxu0 %v623
        %669 = vmatpush.bf16.msra.mxu0 %v622
        %670 = vmatpush.bf16.msra.mxu0 %v621
        %671 = vmatpush.bf16.msra.mxu0 %v620
        %672 = vmatpush.bf16.msra.mxu0 %v619
        %673 = vmatpush.bf16.msra.mxu0 %v618
        %674 = vmatpush.bf16.msra.mxu0 %v617
        %675 = vmatpush.bf16.msra.mxu0 %v616
        %676 = vmatmul.bf16.gmra.mxu0 %v632
        %v677 = vpop.f32.mrf.mxu0
        %v678 = vadd.f32 %v666, %v677
        %v679 = vpop.f32.mrf.mxu0
        %v680 = vadd.f32 %v666, %v679
        %681 = vmatmul.bf16.gmra.mxu0 %v634
        %v682 = vpop.f32.mrf.mxu0
        %v683 = vadd.f32 %v666, %v682
        %v684 = vpop.f32.mrf.mxu0
        %v685 = vadd.f32 %v666, %v684
        %686 = vmatmul.bf16.gmra.mxu0 %v636
        %v687 = vpop.f32.mrf.mxu0
        %v688 = vadd.f32 %v666, %v687
        %v689 = vpop.f32.mrf.mxu0
        %v690 = vadd.f32 %v666, %v689
        %691 = vmatmul.bf16.gmra.mxu0 %v638
        %v692 = vpop.f32.mrf.mxu0
        %v693 = vadd.f32 %v666, %v692
        %v694 = vpop.f32.mrf.mxu0
        %v695 = vadd.f32 %v666, %v694
        %696 = vmatmul.bf16.gmra.mxu0 %v640
        %v697 = vpop.f32.mrf.mxu0
        %v698 = vadd.f32 %v666, %v697
        %v699 = vpop.f32.mrf.mxu0
        %v700 = vadd.f32 %v666, %v699
        %701 = vmatmul.bf16.gmra.mxu0 %v642
        %v702 = vpop.f32.mrf.mxu0
        %v703 = vadd.f32 %v666, %v702
        %v704 = vpop.f32.mrf.mxu0
        %v705 = vadd.f32 %v666, %v704
        %706 = vmatmul.bf16.gmra.mxu0 %v644
        %v707 = vpop.f32.mrf.mxu0
        %v708 = vadd.f32 %v666, %v707
        %v709 = vpop.f32.mrf.mxu0
        %v710 = vadd.f32 %v666, %v709
        %711 = vmatmul.bf16.gmra.mxu0 %v646
        %v712 = vpop.f32.mrf.mxu0
        %v713 = vadd.f32 %v666, %v712
        %v714 = vpop.f32.mrf.mxu0
        %v715 = vadd.f32 %v666, %v714
        %716 = vmatmul.bf16.gmra.mxu0 %v648
        %v717 = vpop.f32.mrf.mxu0
        %v718 = vadd.f32 %v666, %v717
        %v719 = vpop.f32.mrf.mxu0
        %v720 = vadd.f32 %v666, %v719
        %721 = vmatmul.bf16.gmra.mxu0 %v650
        %v722 = vpop.f32.mrf.mxu0
        %v723 = vadd.f32 %v666, %v722
        %v724 = vpop.f32.mrf.mxu0
        %v725 = vadd.f32 %v666, %v724
        %726 = vmatmul.bf16.gmra.mxu0 %v652
        %v727 = vpop.f32.mrf.mxu0
        %v728 = vadd.f32 %v666, %v727
        %v729 = vpop.f32.mrf.mxu0
        %v730 = vadd.f32 %v666, %v729
        %731 = vmatmul.bf16.gmra.mxu0 %v654
        %v732 = vpop.f32.mrf.mxu0
        %v733 = vadd.f32 %v666, %v732
        %v734 = vpop.f32.mrf.mxu0
        %v735 = vadd.f32 %v666, %v734
        %736 = vmatmul.bf16.gmra.mxu0 %v656
        %v737 = vpop.f32.mrf.mxu0
        %v738 = vadd.f32 %v666, %v737
        %v739 = vpop.f32.mrf.mxu0
        %v740 = vadd.f32 %v666, %v739
        %741 = vmatmul.bf16.gmra.mxu0 %v658
        %v742 = vpop.f32.mrf.mxu0
        %v743 = vadd.f32 %v666, %v742
        %v744 = vpop.f32.mrf.mxu0
        %v745 = vadd.f32 %v666, %v744
        %746 = vmatmul.bf16.gmra.mxu0 %v660
        %v747 = vpop.f32.mrf.mxu0
        %v748 = vadd.f32 %v666, %v747
        %v749 = vpop.f32.mrf.mxu0
        %v750 = vadd.f32 %v666, %v749
        %751 = vmatmul.bf16.gmra.mxu0 %v662
        %v752 = vpop.f32.mrf.mxu0
        %v753 = vadd.f32 %v666, %v752
        %v754 = vpop.f32.mrf.mxu0
        %v755 = vadd.f32 %v666, %v754
        %756 = vdwg.mxu0
        %757 = vmatpush.bf16.msra.mxu0 %v631
        %758 = vmatpush.bf16.msra.mxu0 %v630
        %759 = vmatpush.bf16.msra.mxu0 %v629
        %760 = vmatpush.bf16.msra.mxu0 %v628
        %761 = vmatpush.bf16.msra.mxu0 %v627
        %762 = vmatpush.bf16.msra.mxu0 %v626
        %763 = vmatpush.bf16.msra.mxu0 %v625
        %764 = vmatpush.bf16.msra.mxu0 %v624
        %765 = vmatmul.bf16.gmra.mxu0 %v633
        %v766 = vpop.f32.mrf.mxu0
        %v767 = vadd.f32 %v678, %v766
        %v768 = vpop.f32.mrf.mxu0
        %v769 = vadd.f32 %v680, %v768
        %770 = vmatmul.bf16.gmra.mxu0 %v635
        %v771 = vpop.f32.mrf.mxu0
        %v772 = vadd.f32 %v683, %v771
        %v773 = vpop.f32.mrf.mxu0
        %v774 = vadd.f32 %v685, %v773
        %775 = vmatmul.bf16.gmra.mxu0 %v637
        %v776 = vpop.f32.mrf.mxu0
        %v777 = vadd.f32 %v688, %v776
        %v778 = vpop.f32.mrf.mxu0
        %v779 = vadd.f32 %v690, %v778
        %780 = vmatmul.bf16.gmra.mxu0 %v639
        %v781 = vpop.f32.mrf.mxu0
        %v782 = vadd.f32 %v693, %v781
        %v783 = vpop.f32.mrf.mxu0
        %v784 = vadd.f32 %v695, %v783
        %785 = vmatmul.bf16.gmra.mxu0 %v641
        %v786 = vpop.f32.mrf.mxu0
        %v787 = vadd.f32 %v698, %v786
        %v788 = vpop.f32.mrf.mxu0
        %v789 = vadd.f32 %v700, %v788
        %790 = vmatmul.bf16.gmra.mxu0 %v643
        %v791 = vpop.f32.mrf.mxu0
        %v792 = vadd.f32 %v703, %v791
        %v793 = vpop.f32.mrf.mxu0
        %v794 = vadd.f32 %v705, %v793
        %795 = vmatmul.bf16.gmra.mxu0 %v645
        %v796 = vpop.f32.mrf.mxu0
        %v797 = vadd.f32 %v708, %v796
        %v798 = vpop.f32.mrf.mxu0
        %v799 = vadd.f32 %v710, %v798
        %800 = vmatmul.bf16.gmra.mxu0 %v647
        %v801 = vpop.f32.mrf.mxu0
        %v802 = vadd.f32 %v713, %v801
        %v803 = vpop.f32.mrf.mxu0
        %v804 = vadd.f32 %v715, %v803
        %805 = vmatmul.bf16.gmra.mxu0 %v649
        %v806 = vpop.f32.mrf.mxu0
        %v807 = vadd.f32 %v718, %v806
        %v808 = vpop.f32.mrf.mxu0
        %v809 = vadd.f32 %v720, %v808
        %810 = vmatmul.bf16.gmra.mxu0 %v651
        %v811 = vpop.f32.mrf.mxu0
        %v812 = vadd.f32 %v723, %v811
        %v813 = vpop.f32.mrf.mxu0
        %v814 = vadd.f32 %v725, %v813
        %815 = vmatmul.bf16.gmra.mxu0 %v653
        %v816 = vpop.f32.mrf.mxu0
        %v817 = vadd.f32 %v728, %v816
        %v818 = vpop.f32.mrf.mxu0
        %v819 = vadd.f32 %v730, %v818
        %820 = vmatmul.bf16.gmra.mxu0 %v655
        %v821 = vpop.f32.mrf.mxu0
        %v822 = vadd.f32 %v733, %v821
        %v823 = vpop.f32.mrf.mxu0
        %v824 = vadd.f32 %v735, %v823
        %825 = vmatmul.bf16.gmra.mxu0 %v657
        %v826 = vpop.f32.mrf.mxu0
        %v827 = vadd.f32 %v738, %v826
        %v828 = vpop.f32.mrf.mxu0
        %v829 = vadd.f32 %v740, %v828
        %830 = vmatmul.bf16.gmra.mxu0 %v659
        %v831 = vpop.f32.mrf.mxu0
        %v832 = vadd.f32 %v743, %v831
        %v833 = vpop.f32.mrf.mxu0
        %v834 = vadd.f32 %v745, %v833
        %835 = vmatmul.bf16.gmra.mxu0 %v661
        %v836 = vpop.f32.mrf.mxu0
        %v837 = vadd.f32 %v748, %v836
        %v838 = vpop.f32.mrf.mxu0
        %v839 = vadd.f32 %v750, %v838
        %840 = vmatmul.bf16.gmra.mxu0 %v663
        %v841 = vpop.f32.mrf.mxu0
        %v842 = vadd.f32 %v753, %v841
        %v843 = vpop.f32.mrf.mxu0
        %v844 = vadd.f32 %v755, %v843
        %845 = vdwg.mxu0
        %v846 = vsub.f32 0.0, %v767
        %v847 = vsub.f32 0.0, %v769
        %v848 = vsub.f32 0.0, %v772
        %v849 = vsub.f32 0.0, %v774
        %v850 = vsub.f32 0.0, %v777
        %v851 = vsub.f32 0.0, %v779
        %v852 = vsub.f32 0.0, %v782
        %v853 = vsub.f32 0.0, %v784
        %v854 = vsub.f32 0.0, %v787
        %v855 = vsub.f32 0.0, %v789
        %v856 = vsub.f32 0.0, %v792
        %v857 = vsub.f32 0.0, %v794
        %v858 = vsub.f32 0.0, %v797
        %v859 = vsub.f32 0.0, %v799
        %v860 = vsub.f32 0.0, %v802
        %v861 = vsub.f32 0.0, %v804
        %v862 = vsub.f32 0.0, %v807
        %v863 = vsub.f32 0.0, %v809
        %v864 = vsub.f32 0.0, %v812
        %v865 = vsub.f32 0.0, %v814
        %v866 = vsub.f32 0.0, %v817
        %v867 = vsub.f32 0.0, %v819
        %v868 = vsub.f32 0.0, %v822
        %v869 = vsub.f32 0.0, %v824
        %v870 = vsub.f32 0.0, %v827
        %v871 = vsub.f32 0.0, %v829
        %v872 = vsub.f32 0.0, %v832
        %v873 = vsub.f32 0.0, %v834
        %v874 = vsub.f32 0.0, %v837
        %v875 = vsub.f32 0.0, %v839
        %v876 = vsub.f32 0.0, %v842
        %v877 = vsub.f32 0.0, %v844
        %v878 = vmul.f32 %v846, 1.442695
        %v879 = vpow.pop %v878
        %v880 = vmul.f32 %v847, 1.442695
        %v881 = vpow.pop %v880
        %v882 = vmul.f32 %v848, 1.442695
        %v883 = vpow.pop %v882
        %v884 = vmul.f32 %v849, 1.442695
        %v885 = vpow.pop %v884
        %v886 = vmul.f32 %v850, 1.442695
        %v887 = vpow.pop %v886
        %v888 = vmul.f32 %v851, 1.442695
        %v889 = vpow.pop %v888
        %v890 = vmul.f32 %v852, 1.442695
        %v891 = vpow.pop %v890
        %v892 = vmul.f32 %v853, 1.442695
        %v893 = vpow.pop %v892
        %v894 = vmul.f32 %v854, 1.442695
        %v895 = vpow.pop %v894
        %v896 = vmul.f32 %v855, 1.442695
        %v897 = vpow.pop %v896
        %v898 = vmul.f32 %v856, 1.442695
        %v899 = vpow.pop %v898
        %v900 = vmul.f32 %v857, 1.442695
        %v901 = vpow.pop %v900
        %v902 = vmul.f32 %v858, 1.442695
        %v903 = vpow.pop %v902
        %v904 = vmul.f32 %v859, 1.442695
        %v905 = vpow.pop %v904
        %v906 = vmul.f32 %v860, 1.442695
        %v907 = vpow.pop %v906
        %v908 = vmul.f32 %v861, 1.442695
        %v909 = vpow.pop %v908
        %v910 = vmul.f32 %v862, 1.442695
        %v911 = vpow.pop %v910
        %v912 = vmul.f32 %v863, 1.442695
        %v913 = vpow.pop %v912
        %v914 = vmul.f32 %v864, 1.442695
        %v915 = vpow.pop %v914
        %v916 = vmul.f32 %v865, 1.442695
        %v917 = vpow.pop %v916
        %v918 = vmul.f32 %v866, 1.442695
        %v919 = vpow.pop %v918
        %v920 = vmul.f32 %v867, 1.442695
        %v921 = vpow.pop %v920
        %v922 = vmul.f32 %v868, 1.442695
        %v923 = vpow.pop %v922
        %v924 = vmul.f32 %v869, 1.442695
        %v925 = vpow.pop %v924
        %v926 = vmul.f32 %v870, 1.442695
        %v927 = vpow.pop %v926
        %v928 = vmul.f32 %v871, 1.442695
        %v929 = vpow.pop %v928
        %v930 = vmul.f32 %v872, 1.442695
        %v931 = vpow.pop %v930
        %v932 = vmul.f32 %v873, 1.442695
        %v933 = vpow.pop %v932
        %v934 = vmul.f32 %v874, 1.442695
        %v935 = vpow.pop %v934
        %v936 = vmul.f32 %v875, 1.442695
        %v937 = vpow.pop %v936
        %v938 = vmul.f32 %v876, 1.442695
        %v939 = vpow.pop %v938
        %v940 = vmul.f32 %v877, 1.442695
        %v941 = vpow.pop %v940
        %v942 = vadd.f32 %v879, 1.0
        %v943 = vadd.f32 %v881, 1.0
        %v944 = vadd.f32 %v883, 1.0
        %v945 = vadd.f32 %v885, 1.0
        %v946 = vadd.f32 %v887, 1.0
        %v947 = vadd.f32 %v889, 1.0
        %v948 = vadd.f32 %v891, 1.0
        %v949 = vadd.f32 %v893, 1.0
        %v950 = vadd.f32 %v895, 1.0
        %v951 = vadd.f32 %v897, 1.0
        %v952 = vadd.f32 %v899, 1.0
        %v953 = vadd.f32 %v901, 1.0
        %v954 = vadd.f32 %v903, 1.0
        %v955 = vadd.f32 %v905, 1.0
        %v956 = vadd.f32 %v907, 1.0
        %v957 = vadd.f32 %v909, 1.0
        %v958 = vadd.f32 %v911, 1.0
        %v959 = vadd.f32 %v913, 1.0
        %v960 = vadd.f32 %v915, 1.0
        %v961 = vadd.f32 %v917, 1.0
        %v962 = vadd.f32 %v919, 1.0
        %v963 = vadd.f32 %v921, 1.0
        %v964 = vadd.f32 %v923, 1.0
        %v965 = vadd.f32 %v925, 1.0
        %v966 = vadd.f32 %v927, 1.0
        %v967 = vadd.f32 %v929, 1.0
        %v968 = vadd.f32 %v931, 1.0
        %v969 = vadd.f32 %v933, 1.0
        %v970 = vadd.f32 %v935, 1.0
        %v971 = vadd.f32 %v937, 1.0
        %v972 = vadd.f32 %v939, 1.0
        %v973 = vadd.f32 %v941, 1.0
        %v974 = vrcp.pop %v942
        %v975 = vrcp.pop %v943
        %v976 = vrcp.pop %v944
        %v977 = vrcp.pop %v945
        %v978 = vrcp.pop %v946
        %v979 = vrcp.pop %v947
        %v980 = vrcp.pop %v948
        %v981 = vrcp.pop %v949
        %v982 = vrcp.pop %v950
        %v983 = vrcp.pop %v951
        %v984 = vrcp.pop %v952
        %v985 = vrcp.pop %v953
        %v986 = vrcp.pop %v954
        %v987 = vrcp.pop %v955
        %v988 = vrcp.pop %v956
        %v989 = vrcp.pop %v957
        %v990 = vrcp.pop %v958
        %v991 = vrcp.pop %v959
        %v992 = vrcp.pop %v960
        %v993 = vrcp.pop %v961
        %v994 = vrcp.pop %v962
        %v995 = vrcp.pop %v963
        %v996 = vrcp.pop %v964
        %v997 = vrcp.pop %v965
        %v998 = vrcp.pop %v966
        %v999 = vrcp.pop %v967
        %v1000 = vrcp.pop %v968
        %v1001 = vrcp.pop %v969
        %v1002 = vrcp.pop %v970
        %v1003 = vrcp.pop %v971
        %v1004 = vrcp.pop %v972
        %v1005 = vrcp.pop %v973
        %v1006 = vpack.c.bf16 %v974, %v974
        %v1007 = vpack.c.bf16 %v975, %v975
        %v1008 = vpack.c.bf16 %v976, %v976
        %v1009 = vpack.c.bf16 %v977, %v977
        %v1010 = vpack.c.bf16 %v978, %v978
        %v1011 = vpack.c.bf16 %v979, %v979
        %v1012 = vpack.c.bf16 %v980, %v980
        %v1013 = vpack.c.bf16 %v981, %v981
        %v1014 = vpack.c.bf16 %v982, %v982
        %v1015 = vpack.c.bf16 %v983, %v983
        %v1016 = vpack.c.bf16 %v984, %v984
        %v1017 = vpack.c.bf16 %v985, %v985
        %v1018 = vpack.c.bf16 %v986, %v986
        %v1019 = vpack.c.bf16 %v987, %v987
        %v1020 = vpack.c.bf16 %v988, %v988
        %v1021 = vpack.c.bf16 %v989, %v989
        %v1022 = vpack.c.bf16 %v990, %v990
        %v1023 = vpack.c.bf16 %v991, %v991
        %v1024 = vpack.c.bf16 %v992, %v992
        %v1025 = vpack.c.bf16 %v993, %v993
        %v1026 = vpack.c.bf16 %v994, %v994
        %v1027 = vpack.c.bf16 %v995, %v995
        %v1028 = vpack.c.bf16 %v996, %v996
        %v1029 = vpack.c.bf16 %v997, %v997
        %v1030 = vpack.c.bf16 %v998, %v998
        %v1031 = vpack.c.bf16 %v999, %v999
        %v1032 = vpack.c.bf16 %v1000, %v1000
        %v1033 = vpack.c.bf16 %v1001, %v1001
        %v1034 = vpack.c.bf16 %v1002, %v1002
        %v1035 = vpack.c.bf16 %v1003, %v1003
        %v1036 = vpack.c.bf16 %v1004, %v1004
        %v1037 = vpack.c.bf16 %v1005, %v1005
        %1038 = vst [vmem:[%s218] sm:$0xf] %v1006
        %1039 = vst [vmem:[%s218 + $0x4] sm:$0xf] %v1007
        %1040 = vst [vmem:[%s218 + $0x8] sm:$0xf] %v1008
        %1041 = vst [vmem:[%s218 + $0xc] sm:$0xf] %v1009
        %1042 = vst [vmem:[%s218 + $0x10] sm:$0xf] %v1010
        %1043 = vst [vmem:[%s218 + $0x14] sm:$0xf] %v1011
        %1044 = vst [vmem:[%s218 + $0x18] sm:$0xf] %v1012
        %1045 = vst [vmem:[%s218 + $0x1c] sm:$0xf] %v1013
        %1046 = vst [vmem:[%s218 + $0x20] sm:$0xf] %v1014
        %1047 = vst [vmem:[%s218 + $0x24] sm:$0xf] %v1015
        %1048 = vst [vmem:[%s218 + $0x28] sm:$0xf] %v1016
        %1049 = vst [vmem:[%s218 + $0x2c] sm:$0xf] %v1017
        %1050 = vst [vmem:[%s218 + $0x30] sm:$0xf] %v1018
        %1051 = vst [vmem:[%s218 + $0x34] sm:$0xf] %v1019
        %1052 = vst [vmem:[%s218 + $0x38] sm:$0xf] %v1020
        %1053 = vst [vmem:[%s218 + $0x3c] sm:$0xf] %v1021
        %1054 = vst [vmem:[%s218 + $0x40] sm:$0xf] %v1022
        %1055 = vst [vmem:[%s218 + $0x44] sm:$0xf] %v1023
        %1056 = vst [vmem:[%s218 + $0x48] sm:$0xf] %v1024
        %1057 = vst [vmem:[%s218 + $0x4c] sm:$0xf] %v1025
        %1058 = vst [vmem:[%s218 + $0x50] sm:$0xf] %v1026
        %1059 = vst [vmem:[%s218 + $0x54] sm:$0xf] %v1027
        %1060 = vst [vmem:[%s218 + $0x58] sm:$0xf] %v1028
        %1061 = vst [vmem:[%s218 + $0x5c] sm:$0xf] %v1029
        %1062 = vst [vmem:[%s218 + $0x60] sm:$0xf] %v1030
        %1063 = vst [vmem:[%s218 + $0x64] sm:$0xf] %v1031
        %1064 = vst [vmem:[%s218 + $0x68] sm:$0xf] %v1032
        %1065 = vst [vmem:[%s218 + $0x6c] sm:$0xf] %v1033
        %1066 = vst [vmem:[%s218 + $0x70] sm:$0xf] %v1034
        %1067 = vst [vmem:[%s218 + $0x74] sm:$0xf] %v1035
        %1068 = vst [vmem:[%s218 + $0x78] sm:$0xf] %v1036
        %1069 = vst [vmem:[%s218 + $0x7c] sm:$0xf] %v1037
        %s1070 = sand.u32 %s137, 1
        %s1071 = scalar_lea.sflag [#allocation3], %s1070
        %s1072 = sand.u32 %s137, 1
        %s1073 = smul.addr %s1072, 128
        %s1074 = scalar_lea.vmem [#allocation2], %s1073
        // Predicated region
        $region41: #{tpu_custom_call.1} parent=39 // pred_check
          %p1075 = pneg %p147
        $region42: #{tpu_custom_call.1} parent=39 // pred_check_branch
          %1077 = sbr.rel (%p1075) target = $region44
        $region43: #{tpu_custom_call.1} parent=39 // pred_region
          %s1078 = smul.u32 32, %s19
          %1080 = vsyncadd %s1071, 0
          %s1081 = smul.addr %s1078, 4
          %s1082 = scalar_lea.hbm %s5, %s1081
          %s1083 = sshll.u32 %s1074, 4
          %s1084 = int_to_ptr.vmem [resolvable:$true] %s1083
          %s1085 = sshll.u32 %s1082, 4
          %s1086 = int_to_ptr.hbm [resolvable:$true] %s1085
          %1091 = dma.vmem_to_hbm [thread:$0]  %s1084, 2048, %s1086, %s1071, 64, 64, 4
        $region44: #{tpu_custom_call.1} parent=39 // pred_fallthru
          _
      $region40: #{tpu_custom_call.1} parent=5 // pred_fallthru
        _
      %p1092 = scmp.le.s32.totalorder 2, %s14
      // Predicated region
      $region45: #{tpu_custom_call.1} parent=5 // pred_check
        %p1093 = pneg %p1092
      $region46: #{tpu_custom_call.1} parent=5 // pred_check_branch
        %1095 = sbr.rel (%p1093) target = $region48
      $region47: #{tpu_custom_call.1} parent=5 // pred_region
        %s1096 = ssub.s32 %s14, 2
        // Predicated region
        $region49: #{tpu_custom_call.1} parent=47 // pred_check
          %p1097 = pneg %p153
        $region50: #{tpu_custom_call.1} parent=47 // pred_check_branch
          %1099 = sbr.rel (%p1097) target = $region52
        $region51: #{tpu_custom_call.1} parent=47 // pred_region
          %s1100 = sand.u32 %s138, 1
          %s1101 = scalar_lea.sflag [#allocation3], %s1100
          %s1102 = sand.u32 %s138, 1
          %s1103 = smul.addr %s1102, 128
          %s1104 = scalar_lea.vmem [#allocation2], %s1103
          %1106 = dma.done %s1101, 2048
        $region52: #{tpu_custom_call.1} parent=47 // pred_fallthru
          _
      $region48: #{tpu_custom_call.1} parent=5 // pred_fallthru
        _
    $region6: #{tpu_custom_call.1} parent=1 // loop_footer
      %s18 = sadd.s32 1, %s14
    $region7: #{tpu_custom_call.1} parent=1 // loop_footer_branch
      %13 = sbr.rel target = $region3
    $region8: #{tpu_custom_call.1} parent=1 // loop_exit
      _
    %1107 = vsyncpa [#allocation3], 1
    %s1108 = scalar_lea.sflag [#allocation3], 1
    %1109 = vsyncpa %s1108, 1

</llo_original>
